<compile_context>
chip_gen: v6e
topology: v6e:2x2x1
jax: 0.10.0
libtpu: 0.0.40
codegen_flags: <defaults>
</compile_context>

<pallas_src>
import functools

import jax
import jax.numpy as jnp
from jax.experimental import pallas as pl
from jax.experimental.pallas import tpu as pltpu


def _round_up(x, m):
    return ((x + m - 1) // m) * m


def _vmem_capacity_bytes():
    """Physical VMEM of the local TPU generation (fallback: 64 MiB, v7x-safe)."""
    try:
        info = pltpu.get_tpu_info()
        for name in ("vmem_capacity_bytes", "vmem_bytes", "vmem_size_bytes"):
            v = getattr(info, name, None)
            if v and 16 * 2**20 <= int(v) <= 2**31:
                return int(v)
    except Exception:
        pass
    return 64 * 1024 * 1024


def _num_tensorcores():
    """2 on v7x-class parts (megacore grid sharding), else 1."""
    try:
        kind = (getattr(jax.devices()[0], "device_kind", "") or "").lower()
        if "v7" in kind:
            return 2
    except Exception:
        pass
    return 1


def _choose_tile(total, max_tile, align):
    """Pick a tile <= max_tile.  Prefer (a) the full dim, then (b) an
    align-multiple that divides `total` (no padding), else (c) the largest
    align-multiple (padding required).  Returns (tile, padded_total)."""
    if total <= max_tile:
        return total, total
    t_max = max(align, (max_tile // align) * align)
    t = t_max
    while t >= align:
        if total % t == 0:
            return t, total
        t -= align
    return t_max, _round_up(total, t_max)


def _plan(B, D, H, *, training, with_code, tb=None, th=None):
    """Generation-aware tile / VMEM-limit selection."""
    cap = _vmem_capacity_bytes()
    budget = int(cap * 0.70)            # leave headroom for compiler scratch

    # ---- batch tile ----
    tb_target = tb if tb is not None else (256 if B >= 256 else 128)
    if training and B >= 64 and _num_tensorcores() >= 2:
        # Batch is the only "parallel" axis of the training grid: keep >= 2
        # blocks so it can shard across both TensorCores on v7x.
        tb_target = min(tb_target, _round_up(-(-B // 2), 32))
    tb_, B_pad = _choose_tile(B, tb_target, 32)

    def _fixed(tb__):
        # x (double-buffered) [+ rec (resident/double-buffered)] f32 tiles
        n = 4 if training else 2
        return n * tb__ * D * 4

    while tb_ > 32 and _fixed(tb_) > budget // 2:
        tb_, B_pad = _choose_tile(B, max(32, tb_ // 2), 32)
    # TODO(synk): for extremely large input_size D, add a D grid axis instead
    # of only shrinking the batch tile.

    # ---- hidden tile: whatever VMEM budget is left, as a function of D ----
    per_th = 2 * D * 4                                  # W tile, double-buffered
    if (not training) or with_code:
        per_th += 2 * tb_                               # uint8 code tile
    avail = max(budget - _fixed(tb_), per_th * 128)
    th_max = max(128, min(2048, (avail // per_th) // 128 * 128))
    if th is not None:
        th_max = min(th_max, max(128, _round_up(th, 128)))
    th_, H_pad = _choose_tile(H, th_max, 128)

    vmem_limit = int(min(cap * 0.9, max(32 * 1024 * 1024, budget * 1.3)))
    return tb_, B_pad, th_, H_pad, vmem_limit


# ---------------- kernels ----------------

def _train_kernel(x_ref, w_ref, rec_ref, *, encode_bf16, decode_bf16):
    k = pl.program_id(1)

    @pl.when(k == 0)
    def _():
        rec_ref[...] = jnp.zeros_like(rec_ref)

    x = x_ref[...]                    # (tb, D)
    w = w_ref[...]                    # (th, D)  -- single weight layout
    xe = x.astype(jnp.bfloat16) if encode_bf16 else x
    we = w.astype(jnp.bfloat16) if encode_bf16 else w
    # enc tile = x @ W_tile.T : contract D against D on the same tile; any
    # transpose Mosaic inserts lands on the (otherwise idle) XLU slot.
    enc = jax.lax.dot_general(xe, we, (((1,), (1,)), ((), ())),
                              preferred_element_type=jnp.float32)   # (tb, th)
    code = enc > 0
    dec_dt = jnp.bfloat16 if decode_bf16 else jnp.float32
    # rec += code @ W_tile ; code in {0,1} is exact in bf16, f32 accumulation.
    rec_ref[...] += jnp.dot(code.astype(dec_dt), w.astype(dec_dt),
                            preferred_element_type=jnp.float32)


def _train_with_code_kernel(x_ref, w_ref, rec_ref, code_ref, *,
                            encode_bf16, decode_bf16):
    k = pl.program_id(1)

    @pl.when(k == 0)
    def _():
        rec_ref[...] = jnp.zeros_like(rec_ref)

    x = x_ref[...]
    w = w_ref[...]
    xe = x.astype(jnp.bfloat16) if encode_bf16 else x
    we = w.astype(jnp.bfloat16) if encode_bf16 else w
    enc = jax.lax.dot_general(xe, we, (((1,), (1,)), ((), ())),
                              preferred_element_type=jnp.float32)
    code = enc > 0
    code_ref[...] = code.astype(code_ref.dtype)
    dec_dt = jnp.bfloat16 if decode_bf16 else jnp.float32
    rec_ref[...] += jnp.dot(code.astype(dec_dt), w.astype(dec_dt),
                            preferred_element_type=jnp.float32)


def _eval_kernel(x_ref, w_ref, code_ref, *, encode_bf16):
    x = x_ref[...]
    w = w_ref[...]
    if encode_bf16:
        x = x.astype(jnp.bfloat16)
        w = w.astype(jnp.bfloat16)
    enc = jax.lax.dot_general(x, w, (((1,), (1,)), ((), ())),
                              preferred_element_type=jnp.float32)
    code_ref[...] = (enc > 0).astype(code_ref.dtype)


# ---------------- wrapper ----------------

def encoder_decoder_forward(x, weight, *, training=True, return_code=False,
                            tb=None, th=None, encode_bf16=False,
                            decode_bf16=True):
    """Forward pass of lightonml EncoderDecoder.

    x:       (B, D) float32 input.
    weight:  (H, D) float32 -- nn.Linear(D, H, bias=False).weight layout.
    training=True  -> rec (B, D) float32        (== enc.float() @ W)
    training=False -> binary code (B, H) uint8  (== (x @ W.T > 0))
    return_code=True (training only) -> (rec, code) from a single fused pass.
    decode_bf16: decode matmul with bf16 operands / f32 accumulation (the
                 {0,1} code operand is exact; only W is bf16-rounded).
    encode_bf16: also run the encode matmul in bf16 (may flip the sign of
                 pre-activations within bf16 rounding of 0); off by default.
    """
    B, D = x.shape
    H, D2 = weight.shape
    assert D == D2, "weight must be (hidden_size, input_size)"

    tb_, B_pad, th_, H_pad, vmem_limit = _plan(
        B, D, H, training=training, with_code=(return_code or not training),
        tb=tb, th=th)

    # Padding only happens when no aligned tile divides the dim; prefer batch
    # / hidden sizes that avoid it (the pad materializes an HBM copy).
    if B_pad != B:
        x = jnp.pad(x, ((0, B_pad - B), (0, 0)))
    if H_pad != H:
        weight = jnp.pad(weight, ((0, H_pad - H), (0, 0)))

    grid = (B_pad // tb_, H_pad // th_)

    x_spec = pl.BlockSpec((tb_, D), lambda i, k: (i, 0))
    w_spec = pl.BlockSpec((th_, D), lambda i, k: (k, 0))
    rec_spec = pl.BlockSpec((tb_, D), lambda i, k: (i, 0))      # resident over k
    code_spec = pl.BlockSpec((tb_, th_), lambda i, k: (i, k))   # lane-dense u8

    def cparams(sem):
        return pltpu.CompilerParams(dimension_semantics=sem,
                                    vmem_limit_bytes=vmem_limit)

    if training:
        flops = 4 * B_pad * D * H_pad
        base_bytes = (2 * B_pad * D + D * H_pad) * 4   # x read, rec write, W read

        if return_code:
            kernel = functools.partial(_train_with_code_kernel,
                                       encode_bf16=encode_bf16,
                                       decode_bf16=decode_bf16)
            rec, code = pl.pallas_call(
                kernel,
                out_shape=(jax.ShapeDtypeStruct((B_pad, D), jnp.float32),
                           jax.ShapeDtypeStruct((B_pad, H_pad), jnp.uint8)),
                grid_spec=pltpu.PrefetchScalarGridSpec(
                    num_scalar_prefetch=0,
                    grid=grid,
                    in_specs=[x_spec, w_spec],
                    out_specs=(rec_spec, code_spec)),
                compiler_params=cparams(("parallel", "arbitrary")),
                cost_estimate=pl.CostEstimate(
                    flops=flops, transcendentals=0,
                    bytes_accessed=base_bytes + B_pad * H_pad),
            )(x, weight)
            return rec[:B], code[:B, :H]

        kernel = functools.partial(_train_kernel,
                                   encode_bf16=encode_bf16,
                                   decode_bf16=decode_bf16)
        rec = pl.pallas_call(
            kernel,
            out_shape=jax.ShapeDtypeStruct((B_pad, D), jnp.float32),
            grid_spec=pltpu.PrefetchScalarGridSpec(
                num_scalar_prefetch=0,
                grid=grid,
                in_specs=[x_spec, w_spec],
                out_specs=rec_spec),
            compiler_params=cparams(("parallel", "arbitrary")),
            cost_estimate=pl.CostEstimate(
                flops=flops, transcendentals=0, bytes_accessed=base_bytes),
        )(x, weight)
        return rec[:B]

    # ---- eval path: binary code, lane-dense uint8 tiles ----
    kernel = functools.partial(_eval_kernel, encode_bf16=encode_bf16)
    code = pl.pallas_call(
        kernel,
        out_shape=jax.ShapeDtypeStruct((B_pad, H_pad), jnp.uint8),
        grid_spec=pltpu.PrefetchScalarGridSpec(
            num_scalar_prefetch=0,
            grid=grid,
            in_specs=[x_spec, w_spec],
            out_specs=code_spec),
        compiler_params=cparams(("parallel", "parallel")),
        cost_estimate=pl.CostEstimate(
            flops=2 * B_pad * D * H_pad, transcendentals=0,
            bytes_accessed=(B_pad * D + D * H_pad) * 4 + B_pad * H_pad),
    )(x, weight)
    return code[:B, :H]


# ---------------- references (plain JAX) ----------------

def _reference(x, weight, training):
    enc = jnp.dot(x, weight.T, precision=jax.lax.Precision.HIGHEST) > 0
    if training:
        return jnp.dot(enc.astype(jnp.float32), weight,
                       precision=jax.lax.Precision.HIGHEST)
    return enc.astype(jnp.uint8)


def _reference_bf16_decode(x, weight):
    enc = jnp.dot(x, weight.T, precision=jax.lax.Precision.HIGHEST) > 0
    return jnp.dot(enc.astype(jnp.bfloat16), weight.astype(jnp.bfloat16),
                   preferred_element_type=jnp.float32)


if __name__ == "__main__":
    key = jax.random.PRNGKey(0)
    kx, kw = jax.random.split(key)

    batch, input_size, hidden_size = 16, 128, 64

    x = jax.random.normal(kx, (batch, input_size), dtype=jnp.float32)
    # deterministic "Kaiming-uniform-like" init for nn.Linear weight (H, D)
    bound = 1.0 / (input_size ** 0.5)
    weight = jax.random.uniform(kw, (hidden_size, input_size),
                                dtype=jnp.float32, minval=-bound, maxval=bound)

    rec_ref = _reference(x, weight, True)
    code_ref = _reference(x, weight, False)
    rec_ref_bf16 = _reference_bf16_decode(x, weight)

    # training path, exact f32 decode
    rec_f32 = encoder_decoder_forward(x, weight, training=True,
                                      decode_bf16=False)
    rec_f32 = jax.block_until_ready(rec_f32)
    assert rec_f32.shape == (batch, input_size) and rec_f32.dtype == jnp.float32
    assert jnp.allclose(rec_f32, rec_ref, atol=1e-4, rtol=1e-5)

    # training path, default bf16 decode (code operand exact; W bf16-rounded)
    rec = encoder_decoder_forward(x, weight, training=True)
    rec = jax.block_until_ready(rec)
    assert jnp.allclose(rec, rec_ref_bf16, atol=1e-4, rtol=1e-4)
    assert jnp.allclose(rec, rec_ref, atol=3e-2, rtol=3e-2)

    # eval path: binary code
    code = encoder_decoder_forward(x, weight, training=False)
    code = jax.block_until_ready(code)
    assert code.shape == (batch, hidden_size) and code.dtype == jnp.uint8
    assert jnp.array_equal(code, code_ref)

    # fused training path: reconstruction + code from a single encode matmul
    rec2, code2 = encoder_decoder_forward(x, weight, training=True,
                                          return_code=True)
    rec2 = jax.block_until_ready(rec2)
    code2 = jax.block_until_ready(code2)
    assert jnp.allclose(rec2, rec_ref_bf16, atol=1e-4, rtol=1e-4)
    assert jnp.array_equal(code2, code_ref)

    print("KERNEL_OK")
</pallas_src>

<mosaic_0001>
module attributes {stable_mosaic.version = 11 : i64} {
  func.func @_train_kernel(%arg0: i32, %arg1: i32, %arg2: memref<16x128xf32, #tpu.memory_space<vmem>>, %arg3: memref<64x128xf32, #tpu.memory_space<vmem>>, %arg4: memref<16x128xf32, #tpu.memory_space<vmem>>) attributes {dimension_semantics = [#tpu.dimension_semantics<parallel>, #tpu.dimension_semantics<arbitrary>], iteration_bounds = array<i64: 1, 1>, scalar_prefetch = 0 : i64, scratch_operands = 0 : i64, tpu.core_type = #tpu.core_type<tc>, window_params = [{transform_indices = @transform_0, window_bounds = array<i64: 16, 128>}, {transform_indices = @transform_1, window_bounds = array<i64: 64, 128>}, {transform_indices = @transform_2, window_bounds = array<i64: 16, 128>}]} {
    %c0_i32 = arith.constant 0 : i32
    %0 = arith.cmpi eq, %arg1, %c0_i32 : i32
    %1 = arith.extui %0 : i1 to i32
    %c0_i32_0 = arith.constant 0 : i32
    %2 = arith.cmpi ne, %1, %c0_i32_0 : i32
    scf.if %2 {
      %cst_10 = arith.constant 0.000000e+00 : f32
      %14 = vector.broadcast %cst_10 : f32 to vector<16x128xf32>
      %c0_11 = arith.constant 0 : index
      %c0_12 = arith.constant 0 : index
      %15 = vector.load %arg4[%c0_11, %c0_12] : memref<16x128xf32, #tpu.memory_space<vmem>>, vector<16x128xf32>
      tpu.vector_store %arg4[%c0_11, %c0_12], %14 {strides = array<i32>} : memref<16x128xf32, #tpu.memory_space<vmem>>, vector<16x128xf32>,
    } else {
    }
    %c0 = arith.constant 0 : index
    %c0_1 = arith.constant 0 : index
    %3 = vector.load %arg2[%c0, %c0_1] : memref<16x128xf32, #tpu.memory_space<vmem>>, vector<16x128xf32>
    %c0_2 = arith.constant 0 : index
    %c0_3 = arith.constant 0 : index
    %4 = vector.load %arg3[%c0_2, %c0_3] : memref<64x128xf32, #tpu.memory_space<vmem>>, vector<64x128xf32>
    %cst = arith.constant dense<0.000000e+00> : vector<16x64xf32>
    %5 = tpu.matmul %3, %4, %cst {dimension_numbers = #tpu.dot_dimension_numbers<[1], [1], [0], [0], [0, 0, 1, 0], [], []>} : vector<16x128xf32>, vector<64x128xf32>, vector<16x64xf32> -> vector<16x64xf32>
    %cst_4 = arith.constant 0.000000e+00 : f32
    %6 = vector.broadcast %cst_4 : f32 to vector<16x64xf32>
    %7 = arith.cmpf ogt, %5, %6 : vector<16x64xf32>
    %c0_5 = arith.constant 0 : index
    %c0_6 = arith.constant 0 : index
    %8 = vector.load %arg4[%c0_5, %c0_6] : memref<16x128xf32, #tpu.memory_space<vmem>>, vector<16x128xf32>
    %9 = arith.extui %7 : vector<16x64xi1> to vector<16x64xi32>
    %10 = arith.sitofp %9 : vector<16x64xi32> to vector<16x64xf32>
    %cst_7 = arith.constant dense<0.000000e+00> : vector<16x128xf32>
    %11 = tpu.matmul %10, %4, %cst_7 {dimension_numbers = #tpu.dot_dimension_numbers<[1], [0], [0], [1], [0, 0, 1, 1], [], []>} : vector<16x64xf32>, vector<64x128xf32>, vector<16x128xf32> -> vector<16x128xf32>
    %12 = arith.addf %8, %11 : vector<16x128xf32>
    %c0_8 = arith.constant 0 : index
    %c0_9 = arith.constant 0 : index
    %13 = vector.load %arg4[%c0_8, %c0_9] : memref<16x128xf32, #tpu.memory_space<vmem>>, vector<16x128xf32>
    tpu.vector_store %arg4[%c0_8, %c0_9], %12 {strides = array<i32>} : memref<16x128xf32, #tpu.memory_space<vmem>>, vector<16x128xf32>,
    return
  }
  func.func @transform_0(%arg0: i32, %arg1: i32) -> (i32, i32) {
    %c0_i32 = arith.constant 0 : i32
    %c0_i32_0 = arith.constant 0 : i32
    return %arg0, %c0_i32 : i32, i32
  }
  func.func @transform_1(%arg0: i32, %arg1: i32) -> (i32, i32) {
    %c0_i32 = arith.constant 0 : i32
    %c0_i32_0 = arith.constant 0 : i32
    return %arg1, %c0_i32 : i32, i32
  }
  func.func @transform_2(%arg0: i32, %arg1: i32) -> (i32, i32) {
    %c0_i32 = arith.constant 0 : i32
    %c0_i32_0 = arith.constant 0 : i32
    return %arg0, %c0_i32 : i32, i32
  }
}

</mosaic_0001>

<llo_original>
// kernel: tpu_custom_call.1
$region0: #{tpu_custom_call.1}
  #allocation0 [shape = 'u32[]', space=smem, size = 0x4, offset = 0x4, fixed_abs, tag = 'smem constant byte address 0x4 - core index']
  #allocation1 [shape = 'u32[144,128]{1,0:T(1,128)}', space=vmem, size = 0x12000, scoped, tag = 'internal scratch']
  %s0 = inlined_call_operand.hbm [shape: f32[16,128], index: 0, kind: input, shape index: {}]
  %s1 = inlined_call_operand.hbm [shape: f32[64,128], index: 1, kind: input, shape index: {}]
  %s2 = inlined_call_operand.hbm [shape: f32[16,128], index: 2, kind: output, shape index: {}]
  %s3 = sld [smem:[#allocation0]]
  $region30: #{tpu_custom_call.1} parent=0
    _
  %s5 = ssub.s32 1, %s3
  %s6 = scalar_select 0, %s5, %s3
  $region1: #{tpu_custom_call.1} parent=0
    #allocation2 [shape = 'u8[8192]{0}', space=vmem, size = 0x2000, scoped, tag = 'input window, operand 0, single buffered']
    #allocation3 [shape = 's32[1]{0}', space=sflag, size = 0x4, scoped, tag = 'scoped memory for tpu_custom_call.1']
    #allocation4 [shape = 's32[1]{0}', space=sflag, size = 0x4, scoped, tag = 'scoped memory for tpu_custom_call.1']
    #allocation5 [shape = 'u8[32768]{0}', space=vmem, size = 0x8000, scoped, tag = 'input window, operand 1, single buffered']
    #allocation6 [shape = 's32[1]{0}', space=sflag, size = 0x4, scoped, tag = 'scoped memory for tpu_custom_call.1']
    #allocation7 [shape = 'u8[8192]{0}', space=vmem, size = 0x2000, scoped, tag = 'output window, operand 0, single buffered']
    %7 = vsyncpa [#allocation3], 0
    %8 = vsyncpa [#allocation6], 0
    %9 = vsyncpa [#allocation4], 0
    // Predicated region
    $region2: #{tpu_custom_call.1} parent=1 // pred_check
      _
    $region3: #{tpu_custom_call.1} parent=1 // pred_check_branch
      %11 = sbr.rel (0) target = $region5
    $region4: #{tpu_custom_call.1} parent=1 // pred_region
      %s13 = ssub.s32 256, 256
      %14 = vsyncadd [#allocation3], %s13
      %s15 = sshll.u32 [#allocation2], 4
      %s16 = int_to_ptr.vmem [resolvable:$true] %s15
      %21 = dma.hbm_to_vmem [thread:$0]  %s0, 256, %s16, [#allocation3], 128, 128, 8
    $region5: #{tpu_custom_call.1} parent=1 // pred_fallthru
      _
    // Predicated region
    $region6: #{tpu_custom_call.1} parent=1 // pred_check
      _
    $region7: #{tpu_custom_call.1} parent=1 // pred_check_branch
      %23 = sbr.rel (0) target = $region9
    $region8: #{tpu_custom_call.1} parent=1 // pred_region
      %s25 = ssub.s32 1024, 1024
      %26 = vsyncadd [#allocation6], %s25
      %s27 = sshll.u32 [#allocation5], 4
      %s28 = int_to_ptr.vmem [resolvable:$true] %s27
      %33 = dma.hbm_to_vmem [thread:$0]  %s1, 1024, %s28, [#allocation6], 128, 128, 8
    $region9: #{tpu_custom_call.1} parent=1 // pred_fallthru
      _
    // Predicated region
    $region10: #{tpu_custom_call.1} parent=1 // pred_check
      _
    $region11: #{tpu_custom_call.1} parent=1 // pred_check_branch
      %35 = sbr.rel (0) target = $region13
    $region12: #{tpu_custom_call.1} parent=1 // pred_region
      %36 = dma.done [#allocation3], 256
    $region13: #{tpu_custom_call.1} parent=1 // pred_fallthru
      _
    // Predicated region
    $region14: #{tpu_custom_call.1} parent=1 // pred_check
      _
    $region15: #{tpu_custom_call.1} parent=1 // pred_check_branch
      %38 = sbr.rel (0) target = $region17
    $region16: #{tpu_custom_call.1} parent=1 // pred_region
      %39 = dma.done [#allocation6], 1024
    $region17: #{tpu_custom_call.1} parent=1 // pred_fallthru
      _
    %p40 = scmp.eq.s32.totalorder 0, 0
    // Predicated region
    $region18: #{tpu_custom_call.1} parent=1 // pred_check
      %p41 = pneg %p40
    $region19: #{tpu_custom_call.1} parent=1 // pred_check_branch
      %43 = sbr.rel (%p41) target = $region21
    $region20: #{tpu_custom_call.1} parent=1 // pred_region
      %44 = vst [vmem:[#allocation7] sm:$0xff] 0.0
      %45 = vst [vmem:[#allocation7 + $0x8] sm:$0xff] 0.0
    $region21: #{tpu_custom_call.1} parent=1 // pred_fallthru
      _
    %v46 = vld [vmem:[#allocation2] sm:$0xff]
    %v47 = vld [vmem:[#allocation2 + $0x8] sm:$0xff]
    %v48 = vld [vmem:[#allocation5] sm:$0xff]
    %v49 = vld [vmem:[#allocation5 + $0x8] sm:$0xff]
    %v50 = vld [vmem:[#allocation5 + $0x10] sm:$0xff]
    %v51 = vld [vmem:[#allocation5 + $0x18] sm:$0xff]
    %v52 = vld [vmem:[#allocation5 + $0x20] sm:$0xff]
    %v53 = vld [vmem:[#allocation5 + $0x28] sm:$0xff]
    %v54 = vld [vmem:[#allocation5 + $0x30] sm:$0xff]
    %v55 = vld [vmem:[#allocation5 + $0x38] sm:$0xff]
    %56 = vmatprep.subr.mxu0 0.0
    %57 = vmatpush1.xpose.msra.mxu0 0.0
    %58 = vmatprep.subr.mxu0 0.0
    %59 = vmatpush1.xpose.msra.mxu0 0.0
    %60 = vmatprep.subr.mxu0 0.0
    %61 = vmatpush1.xpose.msra.mxu0 0.0
    %62 = vmatprep.subr.mxu0 0.0
    %63 = vmatpush1.xpose.msra.mxu0 0.0
    %64 = vmatprep.subr.mxu0 0.0
    %65 = vmatpush1.xpose.msra.mxu0 0.0
    %66 = vmatprep.subr.mxu0 0.0
    %67 = vmatpush1.xpose.msra.mxu0 0.0
    %68 = vmatprep.subr.mxu0 0.0
    %69 = vmatpush1.xpose.msra.mxu0 0.0
    %70 = vmatprep.subr.mxu0 0.0
    %71 = vmatpush1.xpose.msra.mxu0 0.0
    %72 = vmatprep.subr.mxu0 0.0
    %73 = vmatpush1.xpose.msra.mxu0 %v55
    %74 = vmatprep.subr.mxu0 0.0
    %75 = vmatpush1.xpose.msra.mxu0 %v54
    %76 = vmatprep.subr.mxu0 0.0
    %77 = vmatpush1.xpose.msra.mxu0 %v53
    %78 = vmatprep.subr.mxu0 0.0
    %79 = vmatpush1.xpose.msra.mxu0 %v52
    %80 = vmatprep.subr.mxu0 0.0
    %81 = vmatpush1.xpose.msra.mxu0 %v51
    %82 = vmatprep.subr.mxu0 0.0
    %83 = vmatpush1.xpose.msra.mxu0 %v50
    %84 = vmatprep.subr.mxu0 0.0
    %85 = vmatpush1.xpose.msra.mxu0 %v49
    %86 = vmatprep.subr.mxu0 0.0
    %87 = vmatpush1.xpose.msra.mxu0 %v48
    %88 = vmatprep.subr.mxu0 0.0
    %89 = vmatpush2.xpose.msra.mxu0 0.0
    %90 = vmatprep.subr.mxu0 0.0
    %91 = vmatpush2.xpose.msra.mxu0 0.0
    %92 = vmatprep.subr.mxu0 0.0
    %93 = vmatpush2.xpose.msra.mxu0 0.0
    %94 = vmatprep.subr.mxu0 0.0
    %95 = vmatpush2.xpose.msra.mxu0 0.0
    %96 = vmatprep.subr.mxu0 0.0
    %97 = vmatpush2.xpose.msra.mxu0 0.0
    %98 = vmatprep.subr.mxu0 0.0
    %99 = vmatpush2.xpose.msra.mxu0 0.0
    %100 = vmatprep.subr.mxu0 0.0
    %101 = vmatpush2.xpose.msra.mxu0 0.0
    %102 = vmatprep.subr.mxu0 0.0
    %103 = vmatpush2.xpose.msra.mxu0 0.0
    %104 = vmatprep.subr.mxu0 0.0
    %105 = vmatpush2.xpose.msra.mxu0 0.0
    %106 = vmatprep.subr.mxu0 0.0
    %107 = vmatpush2.xpose.msra.mxu0 0.0
    %108 = vmatprep.subr.mxu0 0.0
    %109 = vmatpush2.xpose.msra.mxu0 0.0
    %110 = vmatprep.subr.mxu0 0.0
    %111 = vmatpush2.xpose.msra.mxu0 0.0
    %112 = vmatprep.subr.mxu0 0.0
    %113 = vmatpush2.xpose.msra.mxu0 0.0
    %114 = vmatprep.subr.mxu0 0.0
    %115 = vmatpush2.xpose.msra.mxu0 0.0
    %116 = vmatprep.subr.mxu0 0.0
    %117 = vmatpush2.xpose.msra.mxu0 0.0
    %118 = vmatprep.subr.mxu0 0.0
    %119 = vmatpush2.xpose.msra.mxu0 0.0
    %120 = vmatprep.mubr.f32.mxu0 0.0
    %121 = vmatmul.mubr.f32.gmra.mxu0 %v46
    %v122 = vpop.f32.mrf.mxu0
    %v123 = vadd.f32 0.0, %v122
    %v124 = vpop.f32.mrf.mxu0
    %125 = vmatprep.mubr.f32.mxu0 0.0
    %126 = vmatmul.mubr.f32.gmra.mxu0 %v47
    %v127 = vpop.f32.mrf.mxu0
    %v128 = vadd.f32 0.0, %v127
    %v129 = vpop.f32.mrf.mxu0
    %130 = vdwg.mxu0
    %vm131 = vcmp.gt.f32.partialorder %v123, 0.0
    %vm132 = vcmp.gt.f32.partialorder %v128, 0.0
    %v133 = vld [vmem:[#allocation7] sm:$0xff]
    %v134 = vld [vmem:[#allocation7 + $0x8] sm:$0xff]
    %v135 = vsel %vm131, 1, 0
    %v136 = vsel %vm132, 1, 0
    %v137 = vcvt.s32.f32 %v135
    %v138 = vcvt.s32.f32 %v136
    %vm139 = vcmask 523264
    %v141 = vsel %vm139, %v137, 0
    %v144 = vsel %vm139, %v138, 0
    %146 = vmatprep.subr.mxu0 0.0
    %147 = vmatpush1.msra.mxu0 0.0
    %148 = vmatprep.subr.mxu0 0.0
    %149 = vmatpush1.msra.mxu0 0.0
    %150 = vmatprep.subr.mxu0 0.0
    %151 = vmatpush1.msra.mxu0 0.0
    %152 = vmatprep.subr.mxu0 0.0
    %153 = vmatpush1.msra.mxu0 0.0
    %154 = vmatprep.subr.mxu0 0.0
    %155 = vmatpush1.msra.mxu0 0.0
    %156 = vmatprep.subr.mxu0 0.0
    %157 = vmatpush1.msra.mxu0 0.0
    %158 = vmatprep.subr.mxu0 0.0
    %159 = vmatpush1.msra.mxu0 0.0
    %160 = vmatprep.subr.mxu0 0.0
    %161 = vmatpush1.msra.mxu0 0.0
    %162 = vmatprep.subr.mxu0 0.0
    %163 = vmatpush1.msra.mxu0 %v55
    %164 = vmatprep.subr.mxu0 0.0
    %165 = vmatpush1.msra.mxu0 %v54
    %166 = vmatprep.subr.mxu0 0.0
    %167 = vmatpush1.msra.mxu0 %v53
    %168 = vmatprep.subr.mxu0 0.0
    %169 = vmatpush1.msra.mxu0 %v52
    %170 = vmatprep.subr.mxu0 0.0
    %171 = vmatpush1.msra.mxu0 %v51
    %172 = vmatprep.subr.mxu0 0.0
    %173 = vmatpush1.msra.mxu0 %v50
    %174 = vmatprep.subr.mxu0 0.0
    %175 = vmatpush1.msra.mxu0 %v49
    %176 = vmatprep.subr.mxu0 0.0
    %177 = vmatpush1.msra.mxu0 %v48
    %178 = vmatprep.subr.mxu0 0.0
    %179 = vmatpush2.msra.mxu0 0.0
    %180 = vmatprep.subr.mxu0 0.0
    %181 = vmatpush2.msra.mxu0 0.0
    %182 = vmatprep.subr.mxu0 0.0
    %183 = vmatpush2.msra.mxu0 0.0
    %184 = vmatprep.subr.mxu0 0.0
    %185 = vmatpush2.msra.mxu0 0.0
    %186 = vmatprep.subr.mxu0 0.0
    %187 = vmatpush2.msra.mxu0 0.0
    %188 = vmatprep.subr.mxu0 0.0
    %189 = vmatpush2.msra.mxu0 0.0
    %190 = vmatprep.subr.mxu0 0.0
    %191 = vmatpush2.msra.mxu0 0.0
    %192 = vmatprep.subr.mxu0 0.0
    %193 = vmatpush2.msra.mxu0 0.0
    %194 = vmatprep.subr.mxu0 0.0
    %195 = vmatpush2.msra.mxu0 0.0
    %196 = vmatprep.subr.mxu0 0.0
    %197 = vmatpush2.msra.mxu0 0.0
    %198 = vmatprep.subr.mxu0 0.0
    %199 = vmatpush2.msra.mxu0 0.0
    %200 = vmatprep.subr.mxu0 0.0
    %201 = vmatpush2.msra.mxu0 0.0
    %202 = vmatprep.subr.mxu0 0.0
    %203 = vmatpush2.msra.mxu0 0.0
    %204 = vmatprep.subr.mxu0 0.0
    %205 = vmatpush2.msra.mxu0 0.0
    %206 = vmatprep.subr.mxu0 0.0
    %207 = vmatpush2.msra.mxu0 0.0
    %208 = vmatprep.subr.mxu0 0.0
    %209 = vmatpush2.msra.mxu0 0.0
    %210 = vmatprep.mubr.f32.mxu0 0.0
    %211 = vmatmul.mubr.f32.gmra.mxu0 %v141
    %v212 = vpop.f32.mrf.mxu0
    %v213 = vadd.f32 0.0, %v212
    %v214 = vpop.f32.mrf.mxu0
    %215 = vmatprep.mubr.f32.mxu0 0.0
    %216 = vmatmul.mubr.f32.gmra.mxu0 %v144
    %v217 = vpop.f32.mrf.mxu0
    %v218 = vadd.f32 0.0, %v217
    %v219 = vpop.f32.mrf.mxu0
    %220 = vdwg.mxu0
    %v221 = vadd.f32 %v133, %v213
    %v222 = vadd.f32 %v134, %v218
    %223 = vst [vmem:[#allocation7] sm:$0xff] %v221
    %224 = vst [vmem:[#allocation7 + $0x8] sm:$0xff] %v222
    // Predicated region
    $region22: #{tpu_custom_call.1} parent=1 // pred_check
      _
    $region23: #{tpu_custom_call.1} parent=1 // pred_check_branch
      %226 = sbr.rel (0) target = $region25
    $region24: #{tpu_custom_call.1} parent=1 // pred_region
      %s228 = ssub.s32 256, 256
      %229 = vsyncadd [#allocation4], %s228
      %s230 = sshll.u32 [#allocation7], 4
      %s231 = int_to_ptr.vmem [resolvable:$true] %s230
      %236 = dma.vmem_to_hbm [thread:$0]  %s231, 256, %s2, [#allocation4], 128, 128, 8
    $region25: #{tpu_custom_call.1} parent=1 // pred_fallthru
      _
    // Predicated region
    $region26: #{tpu_custom_call.1} parent=1 // pred_check
      _
    $region27: #{tpu_custom_call.1} parent=1 // pred_check_branch
      %238 = sbr.rel (0) target = $region29
    $region28: #{tpu_custom_call.1} parent=1 // pred_region
      %239 = dma.done [#allocation4], 256
    $region29: #{tpu_custom_call.1} parent=1 // pred_fallthru
      _
    %240 = vsyncpa [#allocation3], 1
    %241 = vsyncpa [#allocation6], 1
    %242 = vsyncpa [#allocation4], 1

</llo_original>
